<compile_context>
chip_gen: v5e
topology: v5e:2x2
jax: 0.10.0
libtpu: 0.0.40
codegen_flags: <defaults>
</compile_context>

<pallas_src>
import functools

import jax
import jax.numpy as jnp
from jax import lax
from jax.experimental import pallas as pl
from jax.experimental.pallas import tpu as pltpu

_LANES = 128
_SUBLANES = 8
_F32 = jnp.float32


def _round_up(x: int, m: int) -> int:
    return ((x + m - 1) // m) * m


def _focal_weight(one_minus_pt, gamma: float):
    """(1 - pt)**gamma. Small integer gamma -> VPU multiplies (EUP stays free)."""
    g = float(gamma)
    if g == int(g) and 0 <= int(g) <= 8:
        ig = int(g)
        if ig == 0:
            return jnp.ones_like(one_minus_pt)
        out = one_minus_pt
        for _ in range(ig - 1):
            out = out * one_minus_pt
        return out
    # Non-integer gamma: guarded exp(g*log(w)) -- no log(0) = -inf intermediates.
    w = jnp.maximum(one_minus_pt, 0.0)
    return jnp.where(w > 0, jnp.exp(g * jnp.log(jnp.maximum(w, 1e-30))), 0.0)


def _place_scalar(out_ref, value):
    """Write `value` at [0, 0] of a lane-dense (8, 128) output block."""
    rows = lax.broadcasted_iota(jnp.int32, out_ref.shape, 0)
    cols = lax.broadcasted_iota(jnp.int32, out_ref.shape, 1)
    out_ref[...] = jnp.where((rows == 0) & (cols == 0), value, 0.0)


# ---------------------------------------------------------------------------
# Packed path: C < 65, k = 128 // C samples per 128-lane row.
# ---------------------------------------------------------------------------
def _packed_kernel(logits_ref, aux_ref, out_ref, acc_ref, *,
                   gamma: float, n_samples: int, n_classes: int, pack: int,
                   k_dim: int, block_rows: int, chunk_rows: int,
                   tiles_per_split: int):
    s = pl.program_id(0)          # split axis ("parallel": 2 TCs on v7x)
    j = pl.program_id(1)          # batch-tile reduction axis ("arbitrary")
    tile = s * tiles_per_split + j   # unclamped: drives the validity mask

    @pl.when(j == 0)
    def _init():
        acc_ref[...] = jnp.zeros_like(acc_ref)

    c = n_classes
    k = pack
    w = k * c

    # 0/1 segment-membership matrices (bf16 MXU operands), built div-free.
    lane_wk = lax.broadcasted_iota(jnp.int32, (w, k_dim), 0)
    seg_wk = lax.broadcasted_iota(jnp.int32, (w, k_dim), 1)
    seg_sum = jnp.where((lane_wk >= seg_wk * c) & (lane_wk < seg_wk * c + c),
                        1.0, 0.0).astype(jnp.bfloat16)          # (W, K)
    seg_kw = lax.broadcasted_iota(jnp.int32, (k_dim, w), 0)
    lane_kw = lax.broadcasted_iota(jnp.int32, (k_dim, w), 1)
    seg_bcast = jnp.where((lane_kw >= seg_kw * c) & (lane_kw < seg_kw * c + c),
                          1.0, 0.0).astype(jnp.bfloat16)        # (K, W)

    row_iota = lax.broadcasted_iota(jnp.int32, (chunk_rows, k_dim), 0)
    col_iota = lax.broadcasted_iota(jnp.int32, (chunk_rows, k_dim), 1)

    # Sub-chunk the (large, DMA-friendly) block so f32 temporaries stay small.
    for c0 in range(0, block_rows, chunk_rows):
        x = logits_ref[c0:c0 + chunk_rows, :].astype(_F32)       # (CH, W)
        m = aux_ref[c0:c0 + chunk_rows, 0:k_dim]                 # (CH, K) f32
        xt = aux_ref[c0:c0 + chunk_rows, k_dim:2 * k_dim]        # (CH, K) f32

        # Per-sample stabilizer rounded to bf16 so the MXU broadcast (one 0/1
        # term per output lane) is bit-exact and consistent with `logpt` below.
        m16 = m.astype(jnp.bfloat16)
        m_bcast = jnp.dot(m16, seg_bcast, preferred_element_type=_F32)  # (CH, W)
        ez = jnp.exp(x - m_bcast)                                # lane-dense EUP
        # hi/lo split -> ~f32-accurate segment sums from bf16 MXU passes.
        ez_hi = ez.astype(jnp.bfloat16)
        ez_lo = (ez - ez_hi.astype(_F32)).astype(jnp.bfloat16)
        se = (jnp.dot(ez_hi, seg_sum, preferred_element_type=_F32) +
              jnp.dot(ez_lo, seg_sum, preferred_element_type=_F32))     # (CH, K)
        lse = jnp.log(se)

        logpt = xt - m16.astype(_F32) - lse                      # (CH, K)
        pt = jnp.exp(logpt)
        loss = -_focal_weight(1.0 - pt, gamma) * logpt

        rows = tile * block_rows + c0 + row_iota
        sample_idx = rows * k + col_iota
        valid = (col_iota < k) & (sample_idx < n_samples)
        loss = jnp.where(valid, loss, 0.0)
        acc_ref[c0:c0 + chunk_rows, :] += loss                   # VMEM accumulate

    @pl.when(j == tiles_per_split - 1)
    def _finalize():
        _place_scalar(out_ref, jnp.sum(acc_ref[...]))


def _focal_loss_packed(logits, targets, gamma, reduction, block_rows):
    n, c = logits.shape
    itemsize = jnp.dtype(logits.dtype).itemsize
    k = _LANES // c                       # samples packed per 128-lane row
    w = k * c
    k_dim = _round_up(k, _SUBLANES)       # padded per-sample lane width

    t32 = targets.astype(jnp.int32)
    # O(N) precompute in plain XLA (one fused extra pass over logits): the
    # per-sample max (softmax stabilizer) and the target-class logit.
    m = jnp.max(logits, axis=1).astype(_F32)
    xt = jnp.take_along_axis(logits, t32[:, None], axis=1)[:, 0].astype(_F32)

    n_pad = _round_up(n, k)
    if n_pad != n:
        pad = n_pad - n
        logits = jnp.pad(logits, ((0, pad), (0, 0)))
        m = jnp.pad(m, (0, pad))
        xt = jnp.pad(xt, (0, pad))
    n_rows = n_pad // k

    packed = logits.reshape(n_rows, w)            # free row-major reshape
    m_p = jnp.pad(m.reshape(n_rows, k), ((0, 0), (0, k_dim - k)))
    xt_p = jnp.pad(xt.reshape(n_rows, k), ((0, 0), (0, k_dim - k)))
    aux = jnp.concatenate([m_p, xt_p], axis=1)    # (n_rows, 2*k_dim) f32

    # --- block sizing & explicit VMEM accounting (lane-padded) ---
    chunk_target = 256
    if block_rows is not None:
        rb = max(16, _round_up(int(block_rows), 16))
        ch = min(rb, chunk_target)
        rb = _round_up(rb, ch)
    else:
        nr16 = max(16, _round_up(n_rows, 16))
        if nr16 <= chunk_target:
            rb, ch = nr16, nr16
        else:
            ch = chunk_target
            rb = min(2048, _round_up(n_rows, ch))

    w_pad = _round_up(w, _LANES)
    per_row_bytes = (2 * w_pad * itemsize         # double-buffered logits blocks
                     + 2 * _LANES * 4             # double-buffered aux (lane pad)
                     + _LANES * 4)                # f32 accumulator scratch
    temp_bytes = 8 * ch * w_pad * 4               # per-chunk f32 temporaries
    need = rb * per_row_bytes + temp_bytes + 2 * _SUBLANES * _LANES * 4 + (1 << 20)
    vmem_limit = int(min(32 << 20, max(16 << 20, need + (4 << 20))))

    total_tiles = pl.cdiv(n_rows, rb)
    num_splits = 2 if total_tiles >= 2 else 1     # unconditional v7x 2-TC split
    tps = pl.cdiv(total_tiles, num_splits)

    kernel = functools.partial(
        _packed_kernel, gamma=float(gamma), n_samples=n, n_classes=c,
        pack=k, k_dim=k_dim, block_rows=rb, chunk_rows=ch, tiles_per_split=tps)

    def block_index(s_, j_):
        # Clamp so the over-provisioned tail tile of an odd split re-reads a
        # valid block; its contribution is masked via sample_idx >= n.
        return (jnp.minimum(s_ * tps + j_, total_tiles - 1), 0)

    cost = pl.CostEstimate(
        flops=int(14 * n * c + 40 * n),
        transcendentals=int(n * c + 2 * n),
        bytes_accessed=int(n * c * itemsize + 16 * n +
                           num_splits * _SUBLANES * _LANES * 4))

    partials = pl.pallas_call(
        kernel,
        out_shape=jax.ShapeDtypeStruct((_SUBLANES * num_splits, _LANES), _F32),
        grid=(num_splits, tps),
        in_specs=[
            pl.BlockSpec((rb, w), block_index),
            pl.BlockSpec((rb, 2 * k_dim), block_index),
        ],
        out_specs=pl.BlockSpec((_SUBLANES, _LANES), lambda s_, j_: (s_, 0)),
        scratch_shapes=[pltpu.VMEM((rb, k_dim), _F32)],
        compiler_params=pltpu.CompilerParams(
            dimension_semantics=("parallel", "arbitrary"),
            vmem_limit_bytes=vmem_limit),
        cost_estimate=cost,
    )(packed, aux)

    total = jnp.sum(partials)                     # only [8*s, 0] entries non-zero
    if reduction == "mean":
        return total / jnp.float32(n)
    return total


# ---------------------------------------------------------------------------
# Unpacked path: C >= 65 (vregs already reasonably lane-dense).
# ---------------------------------------------------------------------------
def _unpacked_kernel(logits_ref, targets_ref, out_ref, acc_ref, *,
                     gamma: float, n_samples: int, block_rows: int,
                     tiles_per_split: int):
    s = pl.program_id(0)
    j = pl.program_id(1)
    tile = s * tiles_per_split + j

    @pl.when(j == 0)
    def _init():
        acc_ref[...] = jnp.zeros_like(acc_ref)

    x = logits_ref[...].astype(_F32)              # (R, C)
    t = targets_ref[...]                          # (R, 1) int32
    r, c = x.shape

    m = jnp.max(x, axis=1, keepdims=True)
    z = x - m
    lse = jnp.log(jnp.sum(jnp.exp(z), axis=1, keepdims=True))
    class_ids = lax.broadcasted_iota(jnp.int32, (r, c), 1)
    z_t = jnp.sum(jnp.where(class_ids == t, z, 0.0), axis=1, keepdims=True)
    logpt = z_t - lse
    pt = jnp.exp(logpt)
    loss = -_focal_weight(1.0 - pt, gamma) * logpt

    rows = tile * block_rows + lax.broadcasted_iota(jnp.int32, (r, 1), 0)
    loss = jnp.where(rows < n_samples, loss, 0.0)
    acc_ref[...] += loss

    @pl.when(j == tiles_per_split - 1)
    def _finalize():
        _place_scalar(out_ref, jnp.sum(acc_ref[...]))


def _focal_loss_unpacked(logits, targets, gamma, reduction, block_rows):
    n, c = logits.shape
    itemsize = jnp.dtype(logits.dtype).itemsize
    t2 = targets.astype(jnp.int32).reshape(n, 1)

    c_pad = _round_up(c, _LANES)
    per_row = 2 * c_pad * itemsize + 2 * _LANES * 4 + _LANES * 4 + 7 * c_pad * 4
    if block_rows is None:
        budget = 10 << 20
        rb = max(16, min(2048, (budget // per_row) // 16 * 16))
    else:
        rb = max(16, _round_up(int(block_rows), 16))
    rb = min(rb, max(16, _round_up(n, 16)))
    need = rb * per_row + (2 << 20)
    vmem_limit = int(min(32 << 20, max(16 << 20, need + (4 << 20))))

    total_tiles = pl.cdiv(n, rb)
    num_splits = 2 if total_tiles >= 2 else 1
    tps = pl.cdiv(total_tiles, num_splits)

    kernel = functools.partial(_unpacked_kernel, gamma=float(gamma), n_samples=n,
                               block_rows=rb, tiles_per_split=tps)

    def block_index(s_, j_):
        return (jnp.minimum(s_ * tps + j_, total_tiles - 1), 0)

    cost = pl.CostEstimate(
        flops=int(8 * n * c + 30 * n),
        transcendentals=int(n * c + 2 * n),
        bytes_accessed=int(n * c * itemsize + 4 * n +
                           num_splits * _SUBLANES * _LANES * 4))

    partials = pl.pallas_call(
        kernel,
        out_shape=jax.ShapeDtypeStruct((_SUBLANES * num_splits, _LANES), _F32),
        grid=(num_splits, tps),
        in_specs=[
            pl.BlockSpec((rb, c), block_index),
            pl.BlockSpec((rb, 1), block_index),
        ],
        out_specs=pl.BlockSpec((_SUBLANES, _LANES), lambda s_, j_: (s_, 0)),
        scratch_shapes=[pltpu.VMEM((rb, 1), _F32)],
        compiler_params=pltpu.CompilerParams(
            dimension_semantics=("parallel", "arbitrary"),
            vmem_limit_bytes=vmem_limit),
        cost_estimate=cost,
    )(logits, t2)

    total = jnp.sum(partials)
    if reduction == "mean":
        return total / jnp.float32(n)
    return total


def focal_loss(logits: jax.Array, targets: jax.Array, gamma: float = 2.0,
               reduction: str = "mean", block_rows: int | None = None
               ) -> jax.Array:
    """Pallas implementation of FocalLoss.forward for 2-D logits [N, C]."""
    assert logits.ndim == 2, "expected logits of shape [N, C]"
    if reduction not in ("mean", "sum"):
        # TODO(synk): reduction='none' (per-sample loss output) not wired up.
        raise NotImplementedError("only 'mean' and 'sum' reductions supported")
    _, c = logits.shape
    if _LANES // max(c, 1) >= 2:
        return _focal_loss_packed(logits, targets, gamma, reduction, block_rows)
    return _focal_loss_unpacked(logits, targets, gamma, reduction, block_rows)


def _focal_loss_ref(logits, targets, gamma=2.0, reduction="mean"):
    # Pure-JAX reference mirroring the PyTorch module (f32 math, like kernel).
    logp = jax.nn.log_softmax(logits.astype(jnp.float32), axis=1)
    logpt = jnp.take_along_axis(logp, targets.astype(jnp.int32)[:, None],
                                axis=1)[:, 0]
    pt = jnp.exp(logpt)
    loss = -((1.0 - pt) ** gamma) * logpt
    if reduction == "mean":
        return loss.mean()
    return loss.sum()


if __name__ == "__main__":
    key = jax.random.PRNGKey(0)
    keys = jax.random.split(key, 10)

    def _check(name, out, ref, atol, rtol):
        out = jax.block_until_ready(out)
        assert jnp.allclose(out, ref, atol=atol, rtol=rtol), (name, out, ref)

    # 1) tiny f32 batch, C=16 -> packed path (k=8), single tile.
    n1, c1 = 8, 16
    x1 = jax.random.normal(keys[0], (n1, c1), dtype=jnp.float32)
    t1 = jax.random.randint(keys[1], (n1,), 0, c1, dtype=jnp.int32)
    _check("case1", focal_loss(x1, t1, gamma=2.0),
           _focal_loss_ref(x1, t1, 2.0), 1e-5, 1e-5)

    # 2) bf16 logits, C=24 -> packed path (k=5, W=120), ragged batch.
    n2, c2 = 50, 24
    x2 = jax.random.normal(keys[2], (n2, c2), dtype=jnp.bfloat16)
    t2 = jax.random.randint(keys[3], (n2,), 0, c2, dtype=jnp.int32)
    _check("case2", focal_loss(x2, t2, gamma=2.0),
           _focal_loss_ref(x2, t2, 2.0), 5e-4, 1e-4)

    # 3) 'sum' reduction on the same data.
    _check("case3", focal_loss(x2, t2, gamma=2.0, reduction="sum"),
           _focal_loss_ref(x2, t2, 2.0, "sum"), 1e-3, 1e-4)

    # 4) multi-tile packed grid with an odd tile count (unconditional 2-way
    #    split + clamped tail) and packed-row padding (2500 % 8 != 0).
    n4, c4 = 2500, 16
    x4 = jax.random.normal(keys[4], (n4, c4), dtype=jnp.float32)
    t4 = jax.random.randint(keys[5], (n4,), 0, c4, dtype=jnp.int32)
    _check("case4", focal_loss(x4, t4, gamma=2.0, block_rows=64),
           _focal_loss_ref(x4, t4, 2.0), 1e-3, 1e-4)

    # 5) larger batch exercising in-kernel sub-chunking (512 rows -> 2 chunks)
    #    plus the 2-way split.
    n5, c5 = 16384, 16
    x5 = jax.random.normal(keys[6], (n5, c5), dtype=jnp.float32)
    t5 = jax.random.randint(keys[7], (n5,), 0, c5, dtype=jnp.int32)
    _check("case5", focal_loss(x5, t5, gamma=2.0, block_rows=512),
           _focal_loss_ref(x5, t5, 2.0), 1e-3, 1e-4)

    # 6) C >= 65 -> unpacked path.
    n6, c6 = 48, 130
    x6 = jax.random.normal(keys[8], (n6, c6), dtype=jnp.float32)
    t6 = jax.random.randint(keys[9], (n6,), 0, c6, dtype=jnp.int32)
    _check("case6", focal_loss(x6, t6, gamma=2.0),
           _focal_loss_ref(x6, t6, 2.0), 1e-5, 1e-5)

    # 7) non-integer gamma (guarded exp/log pow path).
    _check("case7", focal_loss(x1, t1, gamma=1.5),
           _focal_loss_ref(x1, t1, 1.5), 1e-5, 1e-5)

    print("KERNEL_OK")
</pallas_src>

<mosaic_0001>
module attributes {stable_mosaic.version = 11 : i64} {
  func.func @_packed_kernel(%arg0: i32, %arg1: i32, %arg2: memref<16x128xf32, #tpu.memory_space<vmem>>, %arg3: memref<16x16xf32, #tpu.memory_space<vmem>>, %arg4: memref<8x128xf32, #tpu.memory_space<vmem>>, %arg5: memref<16x8xf32, #tpu.memory_space<vmem>>) attributes {dimension_semantics = [#tpu.dimension_semantics<parallel>, #tpu.dimension_semantics<arbitrary>], iteration_bounds = array<i64: 1, 1>, scalar_prefetch = 0 : i64, scratch_operands = 1 : i64, tpu.core_type = #tpu.core_type<tc>, window_params = [{transform_indices = @transform_0, window_bounds = array<i64: 16, 128>}, {transform_indices = @transform_1, window_bounds = array<i64: 16, 16>}, {transform_indices = @transform_2, window_bounds = array<i64: 8, 128>}]} {
    %c1_i32 = arith.constant 1 : i32
    %0 = arith.muli %arg0, %c1_i32 : i32
    %1 = arith.addi %0, %arg1 : i32
    %c0_i32 = arith.constant 0 : i32
    %2 = arith.cmpi eq, %arg1, %c0_i32 : i32
    %3 = arith.extui %2 : i1 to i32
    %c0_i32_0 = arith.constant 0 : i32
    %4 = arith.cmpi ne, %3, %c0_i32_0 : i32
    scf.if %4 {
      %cst_29 = arith.constant 0.000000e+00 : f32
      %82 = vector.broadcast %cst_29 : f32 to vector<16x8xf32>
      %c0_30 = arith.constant 0 : index
      %c0_31 = arith.constant 0 : index
      %83 = vector.load %arg5[%c0_30, %c0_31] : memref<16x8xf32, #tpu.memory_space<vmem>>, vector<16x8xf32>
      tpu.vector_store %arg5[%c0_30, %c0_31], %82 {strides = array<i32>} : memref<16x8xf32, #tpu.memory_space<vmem>>, vector<16x8xf32>,
    } else {
    }
    %5 = tpu.iota {dimensions = array<i32: 0>} : vector<128x8xi32>
    %6 = tpu.iota {dimensions = array<i32: 1>} : vector<128x8xi32>
    %c16_i32 = arith.constant 16 : i32
    %7 = vector.broadcast %c16_i32 : i32 to vector<128x8xi32>
    %8 = arith.muli %6, %7 : vector<128x8xi32>
    %9 = arith.cmpi sge, %5, %8 : vector<128x8xi32>
    %c16_i32_1 = arith.constant 16 : i32
    %10 = vector.broadcast %c16_i32_1 : i32 to vector<128x8xi32>
    %11 = arith.muli %6, %10 : vector<128x8xi32>
    %c16_i32_2 = arith.constant 16 : i32
    %12 = vector.broadcast %c16_i32_2 : i32 to vector<128x8xi32>
    %13 = arith.addi %11, %12 : vector<128x8xi32>
    %14 = arith.cmpi slt, %5, %13 : vector<128x8xi32>
    %15 = arith.andi %9, %14 : vector<128x8xi1>
    %cst = arith.constant 1.000000e+00 : f32
    %cst_3 = arith.constant 0.000000e+00 : f32
    %16 = vector.broadcast %cst : f32 to vector<128x8xf32>
    %17 = vector.broadcast %cst_3 : f32 to vector<128x8xf32>
    %18 = arith.select %15, %16, %17 : vector<128x8xi1>, vector<128x8xf32>
    %19 = arith.truncf %18 : vector<128x8xf32> to vector<128x8xbf16>
    %20 = tpu.iota {dimensions = array<i32: 0>} : vector<8x128xi32>
    %21 = tpu.iota {dimensions = array<i32: 1>} : vector<8x128xi32>
    %c16_i32_4 = arith.constant 16 : i32
    %22 = vector.broadcast %c16_i32_4 : i32 to vector<8x128xi32>
    %23 = arith.muli %20, %22 : vector<8x128xi32>
    %24 = arith.cmpi sge, %21, %23 : vector<8x128xi32>
    %c16_i32_5 = arith.constant 16 : i32
    %25 = vector.broadcast %c16_i32_5 : i32 to vector<8x128xi32>
    %26 = arith.muli %20, %25 : vector<8x128xi32>
    %c16_i32_6 = arith.constant 16 : i32
    %27 = vector.broadcast %c16_i32_6 : i32 to vector<8x128xi32>
    %28 = arith.addi %26, %27 : vector<8x128xi32>
    %29 = arith.cmpi slt, %21, %28 : vector<8x128xi32>
    %30 = arith.andi %24, %29 : vector<8x128xi1>
    %cst_7 = arith.constant 1.000000e+00 : f32
    %cst_8 = arith.constant 0.000000e+00 : f32
    %31 = vector.broadcast %cst_7 : f32 to vector<8x128xf32>
    %32 = vector.broadcast %cst_8 : f32 to vector<8x128xf32>
    %33 = arith.select %30, %31, %32 : vector<8x128xi1>, vector<8x128xf32>
    %34 = arith.truncf %33 : vector<8x128xf32> to vector<8x128xbf16>
    %35 = tpu.iota {dimensions = array<i32: 0>} : vector<16x8xi32>
    %36 = tpu.iota {dimensions = array<i32: 1>} : vector<16x8xi32>
    %c0 = arith.constant 0 : index
    %c0_9 = arith.constant 0 : index
    %37 = vector.load %arg2[%c0, %c0_9] : memref<16x128xf32, #tpu.memory_space<vmem>>, vector<16x128xf32>
    %c0_10 = arith.constant 0 : index
    %c0_11 = arith.constant 0 : index
    %38 = vector.load %arg3[%c0_10, %c0_11] : memref<16x16xf32, #tpu.memory_space<vmem>>, vector<16x8xf32>
    %c0_12 = arith.constant 0 : index
    %c8 = arith.constant 8 : index
    %39 = vector.load %arg3[%c0_12, %c8] : memref<16x16xf32, #tpu.memory_space<vmem>>, vector<16x8xf32>
    %40 = arith.truncf %38 : vector<16x8xf32> to vector<16x8xbf16>
    %cst_13 = arith.constant dense<0.000000e+00> : vector<16x128xf32>
    %41 = tpu.matmul %40, %34, %cst_13 {dimension_numbers = #tpu.dot_dimension_numbers<[1], [0], [0], [1], [0, 0, 1, 1], [], []>} : vector<16x8xbf16>, vector<8x128xbf16>, vector<16x128xf32> -> vector<16x128xf32>
    %42 = arith.subf %37, %41 : vector<16x128xf32>
    %43 = math.exp %42 : vector<16x128xf32>
    %44 = arith.truncf %43 : vector<16x128xf32> to vector<16x128xbf16>
    %45 = arith.extf %44 : vector<16x128xbf16> to vector<16x128xf32>
    %46 = arith.subf %43, %45 : vector<16x128xf32>
    %47 = arith.truncf %46 : vector<16x128xf32> to vector<16x128xbf16>
    %cst_14 = arith.constant dense<0.000000e+00> : vector<16x8xf32>
    %48 = tpu.matmul %44, %19, %cst_14 {dimension_numbers = #tpu.dot_dimension_numbers<[1], [0], [0], [1], [0, 0, 1, 1], [], []>} : vector<16x128xbf16>, vector<128x8xbf16>, vector<16x8xf32> -> vector<16x8xf32>
    %cst_15 = arith.constant dense<0.000000e+00> : vector<16x8xf32>
    %49 = tpu.matmul %47, %19, %cst_15 {dimension_numbers = #tpu.dot_dimension_numbers<[1], [0], [0], [1], [0, 0, 1, 1], [], []>} : vector<16x128xbf16>, vector<128x8xbf16>, vector<16x8xf32> -> vector<16x8xf32>
    %50 = arith.addf %48, %49 : vector<16x8xf32>
    %51 = math.log %50 : vector<16x8xf32>
    %52 = arith.extf %40 : vector<16x8xbf16> to vector<16x8xf32>
    %53 = arith.subf %39, %52 : vector<16x8xf32>
    %54 = arith.subf %53, %51 : vector<16x8xf32>
    %55 = math.exp %54 : vector<16x8xf32>
    %cst_16 = arith.constant 1.000000e+00 : f32
    %56 = vector.broadcast %cst_16 : f32 to vector<16x8xf32>
    %57 = arith.subf %56, %55 : vector<16x8xf32>
    %58 = arith.mulf %57, %57 : vector<16x8xf32>
    %cst_17 = arith.constant 0.000000e+00 : f32
    %59 = vector.broadcast %cst_17 : f32 to vector<16x8xf32>
    %60 = arith.subf %59, %58 : vector<16x8xf32>
    %61 = arith.mulf %60, %54 : vector<16x8xf32>
    %c16_i32_18 = arith.constant 16 : i32
    %62 = arith.muli %1, %c16_i32_18 : i32
    %c0_i32_19 = arith.constant 0 : i32
    %63 = arith.addi %62, %c0_i32_19 : i32
    %64 = vector.broadcast %63 : i32 to vector<16x8xi32>
    %65 = arith.addi %64, %35 : vector<16x8xi32>
    %c8_i32 = arith.constant 8 : i32
    %66 = vector.broadcast %c8_i32 : i32 to vector<16x8xi32>
    %67 = arith.muli %65, %66 : vector<16x8xi32>
    %68 = arith.addi %67, %36 : vector<16x8xi32>
    %c8_i32_20 = arith.constant 8 : i32
    %69 = vector.broadcast %c8_i32_20 : i32 to vector<16x8xi32>
    %70 = arith.cmpi slt, %36, %69 : vector<16x8xi32>
    %c8_i32_21 = arith.constant 8 : i32
    %71 = vector.broadcast %c8_i32_21 : i32 to vector<16x8xi32>
    %72 = arith.cmpi slt, %68, %71 : vector<16x8xi32>
    %73 = arith.andi %70, %72 : vector<16x8xi1>
    %cst_22 = arith.constant 0.000000e+00 : f32
    %74 = vector.broadcast %cst_22 : f32 to vector<16x8xf32>
    %75 = arith.select %73, %61, %74 : vector<16x8xi1>, vector<16x8xf32>
    %c0_23 = arith.constant 0 : index
    %c0_24 = arith.constant 0 : index
    %76 = vector.load %arg5[%c0_23, %c0_24] : memref<16x8xf32, #tpu.memory_space<vmem>>, vector<16x8xf32>
    %77 = arith.addf %76, %75 : vector<16x8xf32>
    %c0_25 = arith.constant 0 : index
    %c0_26 = arith.constant 0 : index
    %78 = vector.load %arg5[%c0_25, %c0_26] : memref<16x8xf32, #tpu.memory_space<vmem>>, vector<16x8xf32>
    tpu.vector_store %arg5[%c0_25, %c0_26], %77 {strides = array<i32>} : memref<16x8xf32, #tpu.memory_space<vmem>>, vector<16x8xf32>,
    %c0_i32_27 = arith.constant 0 : i32
    %79 = arith.cmpi eq, %arg1, %c0_i32_27 : i32
    %80 = arith.extui %79 : i1 to i32
    %c0_i32_28 = arith.constant 0 : i32
    %81 = arith.cmpi ne, %80, %c0_i32_28 : i32
    scf.if %81 {
      %c0_29 = arith.constant 0 : index
      %c0_30 = arith.constant 0 : index
      %82 = vector.load %arg5[%c0_29, %c0_30] : memref<16x8xf32, #tpu.memory_space<vmem>>, vector<16x8xf32>
      %83 = vector.shape_cast %82 : vector<16x8xf32> to vector<1x16x8xf32>
      %cst_31 = arith.constant dense<0.000000e+00> : vector<1xf32>
      %84 = vector.multi_reduction <add>, %83, %cst_31 [1, 2] : vector<1x16x8xf32> to vector<1xf32>
      %85 = vector.shape_cast %84 : vector<1xf32> to vector<1x1x1xf32>
      %86 = vector.extract %85[0, 0, 0] : f32 from vector<1x1x1xf32>
      %87 = tpu.iota {dimensions = array<i32: 0>} : vector<8x128xi32>
      %88 = tpu.iota {dimensions = array<i32: 1>} : vector<8x128xi32>
      %c0_i32_32 = arith.constant 0 : i32
      %89 = vector.broadcast %c0_i32_32 : i32 to vector<8x128xi32>
      %90 = arith.cmpi eq, %87, %89 : vector<8x128xi32>
      %c0_i32_33 = arith.constant 0 : i32
      %91 = vector.broadcast %c0_i32_33 : i32 to vector<8x128xi32>
      %92 = arith.cmpi eq, %88, %91 : vector<8x128xi32>
      %93 = arith.andi %90, %92 : vector<8x128xi1>
      %cst_34 = arith.constant 0.000000e+00 : f32
      %94 = vector.broadcast %86 : f32 to vector<8x128xf32>
      %95 = vector.broadcast %cst_34 : f32 to vector<8x128xf32>
      %96 = arith.select %93, %94, %95 : vector<8x128xi1>, vector<8x128xf32>
      %c0_35 = arith.constant 0 : index
      %c0_36 = arith.constant 0 : index
      %97 = vector.load %arg4[%c0_35, %c0_36] : memref<8x128xf32, #tpu.memory_space<vmem>>, vector<8x128xf32>
      tpu.vector_store %arg4[%c0_35, %c0_36], %96 {strides = array<i32>} : memref<8x128xf32, #tpu.memory_space<vmem>>, vector<8x128xf32>,
    } else {
    }
    return
  }
  func.func @transform_0(%arg0: i32, %arg1: i32) -> (i32, i32) {
    %c1_i32 = arith.constant 1 : i32
    %0 = arith.muli %arg0, %c1_i32 : i32
    %1 = arith.addi %0, %arg1 : i32
    %c0_i32 = arith.constant 0 : i32
    %2 = arith.minsi %1, %c0_i32 : i32
    %c0_i32_0 = arith.constant 0 : i32
    %c0_i32_1 = arith.constant 0 : i32
    return %2, %c0_i32_0 : i32, i32
  }
  func.func @transform_1(%arg0: i32, %arg1: i32) -> (i32, i32) {
    %c1_i32 = arith.constant 1 : i32
    %0 = arith.muli %arg0, %c1_i32 : i32
    %1 = arith.addi %0, %arg1 : i32
    %c0_i32 = arith.constant 0 : i32
    %2 = arith.minsi %1, %c0_i32 : i32
    %c0_i32_0 = arith.constant 0 : i32
    %c0_i32_1 = arith.constant 0 : i32
    return %2, %c0_i32_0 : i32, i32
  }
  func.func @transform_2(%arg0: i32, %arg1: i32) -> (i32, i32) {
    %c0_i32 = arith.constant 0 : i32
    %c0_i32_0 = arith.constant 0 : i32
    return %arg0, %c0_i32 : i32, i32
  }
}

</mosaic_0001>

<llo_original>
// kernel: tpu_custom_call.1
$region0: #{tpu_custom_call.1}
  #allocation0 [shape = 'u32[]', space=smem, size = 0x4, offset = 0x4, fixed_abs, tag = 'smem constant byte address 0x4 - core index']
  #allocation1 [shape = 'u32[72,128]{1,0:T(1,128)}', space=vmem, size = 0x9000, scoped, tag = 'internal scratch']
  #allocation2 [shape = 'f32[16,8]{1,0:T(8,128)}', space=vmem, size = 0x2000, scoped, tag = 'scratch operand']
  %s0 = inlined_call_operand.hbm [shape: f32[1,128], index: 0, kind: input, shape index: {}]
  %s1 = inlined_call_operand.hbm [shape: f32[1,16], index: 1, kind: input, shape index: {}]
  %s2 = inlined_call_operand.hbm [shape: f32[8,128], index: 2, kind: output, shape index: {}]
  %s3 = sld [smem:[#allocation0]]
  $region34: #{tpu_custom_call.1} parent=0
    _
  %s5 = ssub.s32 1, %s3
  %s6 = scalar_select 0, %s5, %s3
  $region1: #{tpu_custom_call.1} parent=0
    #allocation3 [shape = 'u8[8192]{0}', space=vmem, size = 0x2000, scoped, tag = 'input window, operand 0, single buffered']
    #allocation4 [shape = 's32[1]{0}', space=sflag, size = 0x4, scoped, tag = 'scoped memory for tpu_custom_call.1']
    #allocation5 [shape = 's32[1]{0}', space=sflag, size = 0x4, scoped, tag = 'scoped memory for tpu_custom_call.1']
    #allocation6 [shape = 'u8[8192]{0}', space=vmem, size = 0x2000, scoped, tag = 'input window, operand 1, single buffered']
    #allocation7 [shape = 's32[1]{0}', space=sflag, size = 0x4, scoped, tag = 'scoped memory for tpu_custom_call.1']
    #allocation8 [shape = 'u8[4096]{0}', space=vmem, size = 0x1000, scoped, tag = 'output window, operand 0, single buffered']
    %7 = vsyncpa [#allocation4], 0
    %8 = vsyncpa [#allocation7], 0
    %9 = vsyncpa [#allocation5], 0
    // Predicated region
    $region2: #{tpu_custom_call.1} parent=1 // pred_check
      _
    $region3: #{tpu_custom_call.1} parent=1 // pred_check_branch
      %11 = sbr.rel (0) target = $region5
    $region4: #{tpu_custom_call.1} parent=1 // pred_region
      %s12 = sadd.s32 0, 0
      %p13 = scmp.lt.s32.totalorder %s12, 0
      %s14 = scalar_select %p13, %s12, 0
      %s15 = smul.u32 16, %s14
      %s16 = ssub.s32 1, %s15
      %s17 = ssub.s32 16, %s16
      %s18 = sshll.u32 %s17, 4
      %19 = vsyncadd [#allocation4], %s18
      %p20 = scmp.ne.s32.totalorder 0, %s16
      %s21 = scalar_lea.hbm %s0, %s15
      %s22 = sshll.u32 %s21, 4
      %s23 = int_to_ptr.hbm [resolvable:$true] %s22
      %s24 = sshll.u32 [#allocation3], 4
      %s25 = int_to_ptr.vmem [resolvable:$true] %s24
      %s26 = sshll.u32 %s16, 4
      %30 = dma.hbm_to_vmem [thread:$0]  (%p20), %s23, %s26, %s25, [#allocation4], 16, 16, 1
    $region5: #{tpu_custom_call.1} parent=1 // pred_fallthru
      _
    // Predicated region
    $region6: #{tpu_custom_call.1} parent=1 // pred_check
      _
    $region7: #{tpu_custom_call.1} parent=1 // pred_check_branch
      %32 = sbr.rel (0) target = $region9
    $region8: #{tpu_custom_call.1} parent=1 // pred_region
      %s33 = sadd.s32 0, 0
      %p34 = scmp.lt.s32.totalorder %s33, 0
      %s35 = scalar_select %p34, %s33, 0
      %s36 = smul.u32 16, %s35
      %s37 = ssub.s32 1, %s36
      %s38 = ssub.s32 16, %s37
      %s39 = sshll.u32 %s38, 4
      %40 = vsyncadd [#allocation7], %s39
      %p41 = scmp.ne.s32.totalorder 0, %s37
      %s42 = scalar_lea.hbm %s1, %s36
      %s43 = sshll.u32 %s42, 4
      %s44 = int_to_ptr.hbm [resolvable:$true] %s43
      %s45 = sshll.u32 [#allocation6], 4
      %s46 = int_to_ptr.vmem [resolvable:$true] %s45
      %s47 = sshll.u32 %s37, 4
      %51 = dma.hbm_to_vmem [thread:$0]  (%p41), %s44, %s47, %s46, [#allocation7], 16, 16, 1
    $region9: #{tpu_custom_call.1} parent=1 // pred_fallthru
      _
    // Predicated region
    $region10: #{tpu_custom_call.1} parent=1 // pred_check
      _
    $region11: #{tpu_custom_call.1} parent=1 // pred_check_branch
      %53 = sbr.rel (0) target = $region13
    $region12: #{tpu_custom_call.1} parent=1 // pred_region
      %55 = dma.done [#allocation4], 256
    $region13: #{tpu_custom_call.1} parent=1 // pred_fallthru
      _
    // Predicated region
    $region14: #{tpu_custom_call.1} parent=1 // pred_check
      _
    $region15: #{tpu_custom_call.1} parent=1 // pred_check_branch
      %57 = sbr.rel (0) target = $region17
    $region16: #{tpu_custom_call.1} parent=1 // pred_region
      %59 = dma.done [#allocation7], 256
    $region17: #{tpu_custom_call.1} parent=1 // pred_fallthru
      _
    %s60 = sadd.s32 0, 0
    %p61 = scmp.lt.s32.totalorder %s60, 0
    %s62 = scalar_select %p61, %s60, 0
    %s63 = smul.u32 16, %s62
    %s64 = ssub.s32 1, %s63
    %s65 = sadd.s32 0, 0
    %p66 = scmp.lt.s32.totalorder %s65, 0
    %s67 = scalar_select %p66, %s65, 0
    %s68 = smul.u32 16, %s67
    %s69 = ssub.s32 1, %s68
    %s71 = sadd.s32 0, 0
    %p72 = scmp.eq.s32.totalorder 0, 0
    // Predicated region
    $region18: #{tpu_custom_call.1} parent=1 // pred_check
      %p73 = pneg %p72
    $region19: #{tpu_custom_call.1} parent=1 // pred_check_branch
      %75 = sbr.rel (%p73) target = $region21
    $region20: #{tpu_custom_call.1} parent=1 // pred_region
      %vm76 = vcmask 64512
      %77 = vst.msk [vmem:[#allocation2] sm:$0xff] %vm76, 0.0
      %78 = vst.msk [vmem:[#allocation2 + $0x8] sm:$0xff] %vm76, 0.0
    $region21: #{tpu_custom_call.1} parent=1 // pred_fallthru
      _
    %v79 = vlaneseq
    %v80 = vshrl.u32 %v79, 7
    %v81 = vadd.s32 %v80, 8
    %v82 = vadd.s32 %v80, 16
    %v83 = vadd.s32 %v80, 24
    %v84 = vadd.s32 %v80, 32
    %v85 = vadd.s32 %v80, 40
    %v86 = vadd.s32 %v80, 48
    %v87 = vadd.s32 %v80, 56
    %v88 = vadd.s32 %v80, 64
    %v89 = vadd.s32 %v80, 72
    %v90 = vadd.s32 %v80, 80
    %v91 = vadd.s32 %v80, 88
    %v92 = vadd.s32 %v80, 96
    %v93 = vadd.s32 %v80, 104
    %v94 = vadd.s32 %v80, 112
    %v95 = vadd.s32 %v80, 120
    %v96 = vlaneseq
    %v97 = vand.u32 %v96, 127
    %v98 = vmul.u32 %v97, 16
    %vm99 = vcmp.ge.s32.totalorder %v80, %v98
    %vm100 = vcmp.ge.s32.totalorder %v81, %v98
    %vm101 = vcmp.ge.s32.totalorder %v82, %v98
    %vm102 = vcmp.ge.s32.totalorder %v83, %v98
    %vm103 = vcmp.ge.s32.totalorder %v84, %v98
    %vm104 = vcmp.ge.s32.totalorder %v85, %v98
    %vm105 = vcmp.ge.s32.totalorder %v86, %v98
    %vm106 = vcmp.ge.s32.totalorder %v87, %v98
    %vm107 = vcmp.ge.s32.totalorder %v88, %v98
    %vm108 = vcmp.ge.s32.totalorder %v89, %v98
    %vm109 = vcmp.ge.s32.totalorder %v90, %v98
    %vm110 = vcmp.ge.s32.totalorder %v91, %v98
    %vm111 = vcmp.ge.s32.totalorder %v92, %v98
    %vm112 = vcmp.ge.s32.totalorder %v93, %v98
    %vm113 = vcmp.ge.s32.totalorder %v94, %v98
    %vm114 = vcmp.ge.s32.totalorder %v95, %v98
    %v115 = vadd.s32 %v98, 16
    %vm116 = vcmp.lt.s32.totalorder %v80, %v115
    %vm117 = vcmp.lt.s32.totalorder %v81, %v115
    %vm118 = vcmp.lt.s32.totalorder %v82, %v115
    %vm119 = vcmp.lt.s32.totalorder %v83, %v115
    %vm120 = vcmp.lt.s32.totalorder %v84, %v115
    %vm121 = vcmp.lt.s32.totalorder %v85, %v115
    %vm122 = vcmp.lt.s32.totalorder %v86, %v115
    %vm123 = vcmp.lt.s32.totalorder %v87, %v115
    %vm124 = vcmp.lt.s32.totalorder %v88, %v115
    %vm125 = vcmp.lt.s32.totalorder %v89, %v115
    %vm126 = vcmp.lt.s32.totalorder %v90, %v115
    %vm127 = vcmp.lt.s32.totalorder %v91, %v115
    %vm128 = vcmp.lt.s32.totalorder %v92, %v115
    %vm129 = vcmp.lt.s32.totalorder %v93, %v115
    %vm130 = vcmp.lt.s32.totalorder %v94, %v115
    %vm131 = vcmp.lt.s32.totalorder %v95, %v115
    %vm132 = vmand %vm99, %vm116
    %vm133 = vmand %vm100, %vm117
    %vm134 = vmand %vm101, %vm118
    %vm135 = vmand %vm102, %vm119
    %vm136 = vmand %vm103, %vm120
    %vm137 = vmand %vm104, %vm121
    %vm138 = vmand %vm105, %vm122
    %vm139 = vmand %vm106, %vm123
    %vm140 = vmand %vm107, %vm124
    %vm141 = vmand %vm108, %vm125
    %vm142 = vmand %vm109, %vm126
    %vm143 = vmand %vm110, %vm127
    %vm144 = vmand %vm111, %vm128
    %vm145 = vmand %vm112, %vm129
    %vm146 = vmand %vm113, %vm130
    %vm147 = vmand %vm114, %vm131
    %v148 = vsel %vm132, 1.0, 0.0
    %v149 = vsel %vm133, 1.0, 0.0
    %v150 = vsel %vm134, 1.0, 0.0
    %v151 = vsel %vm135, 1.0, 0.0
    %v152 = vsel %vm136, 1.0, 0.0
    %v153 = vsel %vm137, 1.0, 0.0
    %v154 = vsel %vm138, 1.0, 0.0
    %v155 = vsel %vm139, 1.0, 0.0
    %v156 = vsel %vm140, 1.0, 0.0
    %v157 = vsel %vm141, 1.0, 0.0
    %v158 = vsel %vm142, 1.0, 0.0
    %v159 = vsel %vm143, 1.0, 0.0
    %v160 = vsel %vm144, 1.0, 0.0
    %v161 = vsel %vm145, 1.0, 0.0
    %v162 = vsel %vm146, 1.0, 0.0
    %v163 = vsel %vm147, 1.0, 0.0
    %v164 = vpack.c.bf16 %v149, %v148
    %v165 = vpack.c.bf16 %v151, %v150
    %v166 = vpack.c.bf16 %v153, %v152
    %v167 = vpack.c.bf16 %v155, %v154
    %v168 = vpack.c.bf16 %v157, %v156
    %v169 = vpack.c.bf16 %v159, %v158
    %v170 = vpack.c.bf16 %v161, %v160
    %v171 = vpack.c.bf16 %v163, %v162
    %v172 = vmul.u32 %v80, 16
    %vm173 = vcmp.ge.s32.totalorder %v97, %v172
    %v174 = vadd.s32 %v172, 16
    %vm175 = vcmp.lt.s32.totalorder %v97, %v174
    %vm176 = vmand %vm173, %vm175
    %v177 = vsel %vm176, 1.0, 0.0
    %v178 = vpack.c.bf16 %v177, %v177
    %v179 = vld [vmem:[#allocation3] sm:$0xff]
    %v180 = vld [vmem:[#allocation3 + $0x8] sm:$0xff]
    %v181 = vld [vmem:[#allocation6] sm:$0xff]
    %v182 = vld [vmem:[#allocation6 + $0x8] sm:$0xff]
    %v183 = vpack.c.bf16 %v181, %v181
    %v184 = vpack.c.bf16 %v182, %v182
    %v187 = vunpack.c.l.b16 %v183
    %v188 = vunpack.c.l.b16 %v184
    %v189 = vpack.c.b16 %v188, %v187
    %vm190 = vcmask 64512
    %v192 = vsel %vm190, %v189, 0
    %vm194 = vcmask 1043456
    %v196 = vsel %vm194, %v178, 0
    %198 = vmatpush.bf16.msra.mxu0 0
    %199 = vmatpush.bf16.msra.mxu0 0
    %200 = vmatpush.bf16.msra.mxu0 0
    %201 = vmatpush.bf16.msra.mxu0 0
    %202 = vmatpush.bf16.msra.mxu0 0
    %203 = vmatpush.bf16.msra.mxu0 0
    %204 = vmatpush.bf16.msra.mxu0 0
    %205 = vmatpush.bf16.msra.mxu0 %v196
    %206 = vmatmul.bf16.gmra.mxu0 %v192
    %v207 = vpop.f32.mrf.mxu0
    %v208 = vadd.f32 0.0, %v207
    %v209 = vpop.f32.mrf.mxu0
    %v210 = vadd.f32 0.0, %v209
    %211 = vdwg.mxu0
    %v212 = vsub.f32 %v179, %v208
    %v213 = vsub.f32 %v180, %v210
    %v214 = vmul.f32 %v212, 1.442695
    %v215 = vpow.pop %v214
    %v216 = vmul.f32 %v213, 1.442695
    %v217 = vpow.pop %v216
    %v218 = vpack.c.bf16 %v215, %v215
    %v219 = vpack.c.bf16 %v217, %v217
    %v220 = vunpack.c.l.bf16 %v218
    %v221 = vunpack.c.l.bf16 %v219
    %v222 = vsub.f32 %v215, %v220
    %v223 = vsub.f32 %v217, %v221
    %v224 = vpack.c.bf16 %v223, %v222
    %225 = vmatpush.bf16.msra.mxu0 %v171
    %226 = vmatpush.bf16.msra.mxu0 %v170
    %227 = vmatpush.bf16.msra.mxu0 %v169
    %228 = vmatpush.bf16.msra.mxu0 %v168
    %229 = vmatpush.bf16.msra.mxu0 %v167
    %230 = vmatpush.bf16.msra.mxu0 %v166
    %231 = vmatpush.bf16.msra.mxu0 %v165
    %232 = vmatpush.bf16.msra.mxu0 %v164
    %233 = vmatmul.bf16.gmra.mxu0 %v224
    %v234 = vpop.f32.mrf.mxu0
    %v235 = vadd.f32 0.0, %v234
    %v236 = vpop.f32.mrf.mxu0
    %v237 = vadd.f32 0.0, %v236
    %238 = vdwg.mxu0
    %v241 = vunpack.c.l.b16 %v218
    %v242 = vunpack.c.l.b16 %v219
    %v243 = vpack.c.b16 %v242, %v241
    %245 = vmatpush.bf16.msra.mxu0 %v171
    %246 = vmatpush.bf16.msra.mxu0 %v170
    %247 = vmatpush.bf16.msra.mxu0 %v169
    %248 = vmatpush.bf16.msra.mxu0 %v168
    %249 = vmatpush.bf16.msra.mxu0 %v167
    %250 = vmatpush.bf16.msra.mxu0 %v166
    %251 = vmatpush.bf16.msra.mxu0 %v165
    %252 = vmatpush.bf16.msra.mxu0 %v164
    %253 = vmatmul.bf16.gmra.mxu0 %v243
    %v254 = vpop.f32.mrf.mxu0
    %v255 = vadd.f32 %v235, %v254
    %v256 = vpop.f32.mrf.mxu0
    %v257 = vadd.f32 %v237, %v256
    %258 = vdwg.mxu0
    %v259 = vlog2.pop %v255
    %v260 = vmul.f32 %v259, 0.6931472
    %v261 = vlog2.pop %v257
    %v262 = vmul.f32 %v261, 0.6931472
    %v263 = vunpack.c.l.bf16 %v183
    %v264 = vunpack.c.l.bf16 %v184
    %267 = vrot.lane.b32.xlu0 %v263, 8
    %v268 = vpop.permute.xlu0 %267
    %269 = vrot.lane.b32.xlu0 %v264, 8
    %v270 = vpop.permute.xlu0 %269
    %v273 = vsub.f32 %v181, %v268
    %v274 = vsub.f32 %v182, %v270
    %277 = vrot.lane.b32.xlu0 %v260, 8
    %v278 = vpop.permute.xlu0 %277
    %279 = vrot.lane.b32.xlu0 %v262, 8
    %v280 = vpop.permute.xlu0 %279
    %v283 = vsub.f32 %v273, %v278
    %v284 = vsub.f32 %v274, %v280
    %v285 = vmul.f32 %v283, 1.442695
    %v286 = vpow.pop %v285
    %v287 = vmul.f32 %v284, 1.442695
    %v288 = vpow.pop %v287
    %v289 = vsub.f32 1.0, %v286
    %v290 = vsub.f32 1.0, %v288
    %v291 = vmul.f32 %v289, %v289
    %v292 = vmul.f32 %v290, %v290
    %v293 = vsub.f32 0.0, %v291
    %v294 = vsub.f32 0.0, %v292
    %v295 = vmul.f32 %v293, %v283
    %v296 = vmul.f32 %v294, %v284
    %s297 = smul.u32 %s71, 16
    %v298 = vstv %s297
    %v299 = vadd.s32 %v298, %v80
    %v300 = vadd.s32 %v298, %v81
    %v301 = vmul.u32 %v299, 8
    %v302 = vmul.u32 %v300, 8
    %v303 = vadd.s32 %v301, %v97
    %v304 = vadd.s32 %v302, %v97
    %vm305 = vcmp.lt.s32.totalorder %v97, 8
    %vm306 = vcmp.lt.s32.totalorder %v303, 8
    %vm307 = vcmp.lt.s32.totalorder %v304, 8
    %vm308 = vmand %vm305, %vm306
    %vm309 = vmand %vm305, %vm307
    %312 = vrot.lane.b32.xlu0 %v295, 120
    %v313 = vpop.permute.xlu0 %312
    %314 = vrot.lane.b32.xlu0 %v296, 120
    %v315 = vpop.permute.xlu0 %314
    %v318 = vsel %vm308, %v313, 0.0
    %v319 = vsel %vm309, %v315, 0.0
    %v320 = vld [vmem:[#allocation2] sm:$0xff]
    %v321 = vld [vmem:[#allocation2 + $0x8] sm:$0xff]
    %v322 = vadd.f32 %v320, %v318
    %v323 = vadd.f32 %v321, %v319
    %324 = vst.msk [vmem:[#allocation2] sm:$0xff] %vm190, %v322
    %325 = vst.msk [vmem:[#allocation2 + $0x8] sm:$0xff] %vm190, %v323
    // Predicated region
    $region22: #{tpu_custom_call.1} parent=1 // pred_check
      %p326 = pneg %p72
    $region23: #{tpu_custom_call.1} parent=1 // pred_check_branch
      %328 = sbr.rel (%p326) target = $region25
    $region24: #{tpu_custom_call.1} parent=1 // pred_region
      %v329 = vld [vmem:[#allocation2] sm:$0xff]
      %v330 = vld [vmem:[#allocation2 + $0x8] sm:$0xff]
      %v331 = vsel %vm190, %v329, 0.0
      %v332 = vsel %vm190, %v330, 0.0
      %v333 = vadd.f32 %v331, %v332
      %334 = vadd.xlane.f32.xlu0 %v333
      %v335 = vpop.xlane.xlu0 %334
      %v336 = vrot.slane %v335, 4
      %v337 = vadd.f32 %v335, %v336
      %v338 = vrot.slane %v337, 2
      %v339 = vadd.f32 %v337, %v338
      %v340 = vrot.slane %v339, 1
      %v341 = vadd.f32 %v339, %v340
      %s342 = vtos %v341
      %vm343 = vcmp.eq.s32.totalorder %v80, 0
      %vm344 = vcmp.eq.s32.totalorder %v97, 0
      %vm345 = vmand %vm343, %vm344
      %v346 = vstv %s342
      %v347 = vsel %vm345, %v346, 0.0
      %348 = vst [vmem:[#allocation8] sm:$0xff] %v347
    $region25: #{tpu_custom_call.1} parent=1 // pred_fallthru
      _
    // Predicated region
    $region26: #{tpu_custom_call.1} parent=1 // pred_check
      _
    $region27: #{tpu_custom_call.1} parent=1 // pred_check_branch
      %350 = sbr.rel (0) target = $region29
    $region28: #{tpu_custom_call.1} parent=1 // pred_region
      %352 = vsyncadd [#allocation5], 0
      %s354 = sshll.u32 [#allocation8], 4
      %s355 = int_to_ptr.vmem [resolvable:$true] %s354
      %s356 = sshll.u32 %s2, 4
      %s357 = int_to_ptr.hbm [resolvable:$true] %s356
      %359 = dma.vmem_to_hbm [thread:$0]  %s355, 128, %s357, [#allocation5]
    $region29: #{tpu_custom_call.1} parent=1 // pred_fallthru
      _
    // Predicated region
    $region30: #{tpu_custom_call.1} parent=1 // pred_check
      _
    $region31: #{tpu_custom_call.1} parent=1 // pred_check_branch
      %361 = sbr.rel (0) target = $region33
    $region32: #{tpu_custom_call.1} parent=1 // pred_region
      %363 = dma.done [#allocation5], 128
    $region33: #{tpu_custom_call.1} parent=1 // pred_fallthru
      _
    %364 = vsyncpa [#allocation4], 1
    %365 = vsyncpa [#allocation7], 1
    %366 = vsyncpa [#allocation5], 1

</llo_original>
